<compile_context>
chip_gen: v5e
topology: v5e:2x2
jax: 0.10.0
libtpu: 0.0.40
codegen_flags: <defaults>
</compile_context>

<pallas_src>
import functools

import jax
import jax.numpy as jnp
from jax.experimental import pallas as pl
from jax.experimental.pallas import tpu as pltpu

_TM_MAX = 512        # largest batch tile (rows) in the tiled path
_SMALL_BATCH = 256   # up to this many (padded) rows: single block, no grid


def _round_up(x, m):
    return ((x + m - 1) // m) * m


def _sublane(dtype):
    # Minimum sublane tile for the dtype: f32 -> 8 rows, bf16 -> 16, int8 -> 32.
    return 8 * max(1, 4 // jnp.dtype(dtype).itemsize)


def _vmem_capacity_bytes():
    """Physical VMEM of the local TPU; conservative default if unknown."""
    try:
        info = pltpu.get_tpu_info()
        cap = getattr(info, "vmem_capacity_bytes", None)
        if cap:
            return int(cap)
    except Exception:
        pass
    return 64 * 1024 * 1024   # v7x per-TC VMEM (smallest across generations)


def _maybe_vmem_limit(need_bytes, cap):
    """Raise the scoped-VMEM limit only when the estimate needs it."""
    if need_bytes <= 16 * 1024 * 1024:   # smallest default scoped limit (v5e)
        return None
    return int(min(0.9 * cap, need_bytes * 1.25 + (1 << 20)))


def _pick_tiles(m, sub):
    """Return (batch_tile, padded_batch) for a batch of m rows."""
    m8 = _round_up(max(m, 1), sub)
    if m8 <= _SMALL_BATCH:
        return m8, m8                       # one whole-VMEM block, no grid
    # >= 2 batch tiles so a 2-TC chip (v7x) can shard the grid across cores;
    # tile capped at _TM_MAX to bound VMEM / vreg pressure.
    tm = min(_TM_MAX, _round_up(pl.cdiv(m8, 2), sub))
    return tm, _round_up(m8, tm)


def _activation_schedule(n_layers):
    acts = []
    for ix in range(n_layers):
        if ix < n_layers - 2:
            acts.append("relu")
        elif ix == n_layers - 1:
            acts.append("sigmoid")
        else:
            acts.append("none")
    return tuple(acts)


def _apply_act(y, act):
    if act == "relu":
        return jnp.maximum(y, 0.0)
    if act == "sigmoid":
        return jax.nn.sigmoid(y)
    return y   # "none": the second-to-last layer has no activation


def _fused_mlp_kernel(*refs, acts):
    """Fused MLP: x -> (Linear [+act]) * n_layers, all resident in VMEM.

    refs = (x_ref, w1_ref, b1_ref, ..., wn_ref, bn_ref, o_ref)
      x_ref : (M, K0)      VMEM
      wi_ref: (Ki, Ni)     VMEM   (pre-transposed, so plain x @ W)
      bi_ref: (1, Ni)      VMEM
      o_ref : (M, N_last)  VMEM
    acts: static tuple of "relu" / "none" / "sigmoid", one per layer.
    """
    x_ref = refs[0]
    o_ref = refs[-1]
    wb_refs = refs[1:-1]

    y = x_ref[...]
    for i, act in enumerate(acts):
        w = wb_refs[2 * i][...]
        b = wb_refs[2 * i + 1][...]
        # NOTE: casting y/w to bf16 here (keeping f32 accumulation via
        # preferred_element_type) gives ~3x MXU throughput on v6e/v7x, but is
        # only worth it once MXU-bound; kept f32 for exact PyTorch parity.
        y = jnp.dot(y, w, preferred_element_type=jnp.float32) + b
        y = _apply_act(y, act)
    o_ref[...] = y.astype(o_ref.dtype)


def _linear_act_kernel(x_ref, w_ref, b_ref, o_ref, *, act):
    """One fused Linear (+ activation) layer: o = act(x @ W + b)."""
    y = jnp.dot(x_ref[...], w_ref[...], preferred_element_type=jnp.float32)
    y = _apply_act(y + b_ref[...], act)
    o_ref[...] = y.astype(o_ref.dtype)


@jax.jit
def _fused_forward(x, params):
    """All layers in ONE pallas_call; weights + activations never leave VMEM."""
    n = len(params)
    acts = _activation_schedule(n)
    M, K0 = x.shape
    n_out = params[-1][0].shape[1]
    itemsize = jnp.dtype(x.dtype).itemsize
    widths = [K0] + [w.shape[1] for w, _ in params]

    tm, m_pad = _pick_tiles(M, _sublane(x.dtype))
    if m_pad != M:
        # Rows are independent; padded rows are sliced off after the call.
        x = jnp.pad(x, ((0, m_pad - M), (0, 0)))

    inputs = [x]
    for w, b in params:
        inputs.append(w)
        inputs.append(b.reshape(1, -1))   # (1, N): clean sublane broadcast

    kernel = functools.partial(_fused_mlp_kernel, acts=acts)
    out_shape = jax.ShapeDtypeStruct((m_pad, n_out), x.dtype)

    cap = _vmem_capacity_bytes()
    w_bytes = sum(int(w.size) + int(b.size) for w, b in params) * itemsize

    if m_pad == tm:
        # Small batch: no grid, every operand is one whole-array VMEM block.
        need = w_bytes + itemsize * m_pad * (sum(widths) + max(widths))
        limit = _maybe_vmem_limit(need, cap)
        call_kwargs = {}
        if limit is not None:
            call_kwargs["compiler_params"] = pltpu.CompilerParams(
                vmem_limit_bytes=limit)
        out = pl.pallas_call(
            kernel,
            out_shape=out_shape,
            in_specs=[pl.BlockSpec(memory_space=pltpu.MemorySpace.VMEM)]
            * len(inputs),
            out_specs=pl.BlockSpec(memory_space=pltpu.MemorySpace.VMEM),
            **call_kwargs,
        )(*inputs)
    else:
        # Batch-tiled grid. Weights/biases have a constant index_map (DMA'd
        # once, reused by every tile); single-buffer them when double-buffering
        # would eat a noticeable fraction of VMEM.
        single_buf = 2 * w_bytes > cap // 4
        wb_kwargs = {"pipeline_mode": pl.Buffered(1)} if single_buf else {}

        in_specs = [pl.BlockSpec((tm, K0), lambda i: (i, 0))]
        for w, b in params:
            ki, ni = w.shape
            in_specs.append(pl.BlockSpec((ki, ni), lambda i: (0, 0), **wb_kwargs))
            in_specs.append(pl.BlockSpec((1, ni), lambda i: (0, 0), **wb_kwargs))

        need = ((1 if single_buf else 2) * w_bytes
                + 2 * itemsize * tm * (K0 + n_out)     # double-buffered x / out tiles
                + 2 * itemsize * tm * max(widths))      # live activation values
        limit = _maybe_vmem_limit(need, cap)
        cp_kwargs = {"dimension_semantics": ("parallel",)}
        if limit is not None:
            cp_kwargs["vmem_limit_bytes"] = limit

        out = pl.pallas_call(
            kernel,
            out_shape=out_shape,
            grid=(m_pad // tm,),
            in_specs=in_specs,
            out_specs=pl.BlockSpec((tm, n_out), lambda i: (i, 0)),
            compiler_params=pltpu.CompilerParams(**cp_kwargs),
        )(*inputs)

    return out[:M].reshape(-1)   # drop padding rows, then torch .flatten()


@jax.jit
def _layerwise_forward(x, params):
    """Fallback: one pallas_call per Linear layer (each layer's W/b in VMEM).

    Used when the all-weights-resident fused kernel would not fit in VMEM
    (e.g. a big MLP on v7x's 64 MiB). Activations round-trip HBM between
    layers, but each layer is still a fused matmul + bias + activation kernel.
    """
    acts = _activation_schedule(len(params))
    M = x.shape[0]
    tm, m_pad = _pick_tiles(M, _sublane(x.dtype))
    y = x
    if m_pad != M:
        y = jnp.pad(y, ((0, m_pad - M), (0, 0)))

    for (w, b), act in zip(params, acts):
        ki, ni = w.shape
        kernel = functools.partial(_linear_act_kernel, act=act)
        out_shape = jax.ShapeDtypeStruct((m_pad, ni), y.dtype)
        b2 = b.reshape(1, -1)
        if m_pad == tm:
            y = pl.pallas_call(
                kernel,
                out_shape=out_shape,
                in_specs=[pl.BlockSpec(memory_space=pltpu.MemorySpace.VMEM)] * 3,
                out_specs=pl.BlockSpec(memory_space=pltpu.MemorySpace.VMEM),
            )(y, w, b2)
        else:
            y = pl.pallas_call(
                kernel,
                out_shape=out_shape,
                grid=(m_pad // tm,),
                in_specs=[
                    pl.BlockSpec((tm, ki), lambda i: (i, 0)),
                    pl.BlockSpec((ki, ni), lambda i: (0, 0)),
                    pl.BlockSpec((1, ni), lambda i: (0, 0)),
                ],
                out_specs=pl.BlockSpec((tm, ni), lambda i: (i, 0)),
                compiler_params=pltpu.CompilerParams(
                    dimension_semantics=("parallel",)),
            )(y, w, b2)
    # TODO(synk): add in-layer K/N tiling for single layers too large for VMEM;
    # not needed at agent-MLP sizes.
    return y[:M].reshape(-1)


def agent_model_forward(x, params):
    """Forward pass of AgentModel (a stack of nn.Linear layers).

    x: (M, d_in) f32 activations.
    params: list of (W(in,out), bias(out,)) per layer (PyTorch W pre-transposed).
    Returns the flattened output, matching torch `.flatten()` of (M, d_out).

    Dispatch amortization: when the agent is evaluated repeatedly (rollouts),
    stack timesteps/agents into one batch and call this once — at these layer
    sizes launch/DMA overhead dwarfs the compute, so one batched call is
    ~100x cheaper per step than per-step calls.
    """
    M, K0 = x.shape
    itemsize = jnp.dtype(x.dtype).itemsize
    widths = [K0] + [w.shape[1] for w, _ in params]
    w_bytes = sum(int(w.size) + int(b.size) for w, b in params) * itemsize
    tm, _ = _pick_tiles(M, _sublane(x.dtype))
    act_bytes = itemsize * tm * (widths[0] + widths[-1] + 2 * max(widths))
    cap = _vmem_capacity_bytes()
    if w_bytes + act_bytes > int(0.7 * cap):
        # All-weights-resident fused kernel will not fit; degrade gracefully.
        return _layerwise_forward(x, params)
    return _fused_forward(x, params)


def init_params(key, dims):
    """dims = [d_in, h1, ..., d_out]; PyTorch Linear(d_i, d_{i+1}) weights
    stored as (out, in) then transposed to (in, out) for the kernel."""
    params = []
    for i in range(len(dims) - 1):
        fan_in, fan_out = dims[i], dims[i + 1]
        key, kw, kb = jax.random.split(key, 3)
        bound = 1.0 / jnp.sqrt(fan_in)
        w_torch = jax.random.uniform(kw, (fan_out, fan_in), jnp.float32,
                                     -bound, bound)      # PyTorch (out, in)
        b = jax.random.uniform(kb, (fan_out,), jnp.float32, -bound, bound)
        params.append((jnp.transpose(w_torch), b))       # kernel wants (in, out)
    return params


if __name__ == "__main__":
    key = jax.random.PRNGKey(0)
    k_in, k_par = jax.random.split(key)

    dims = [32, 64, 64, 16, 4]   # 4 Linear layers: relu, relu, none, sigmoid
    params = init_params(k_par, dims)

    def ref_forward(xr):
        # Pure-JAX reference matching the PyTorch forward semantics.
        y = xr
        for ix, (w, b) in enumerate(params):
            y = y @ w + b
            if ix < len(params) - 2:
                y = jnp.maximum(y, 0.0)
            elif ix == len(params) - 1:
                y = jax.nn.sigmoid(y)
        return y.reshape(-1)

    # 1) Tiny batch (typical per-step agent eval) -> fused no-grid path.
    x = jax.random.normal(k_in, (2, dims[0]), jnp.float32)
    out = agent_model_forward(x, params)
    jax.block_until_ready(out)
    assert out.shape == (2 * dims[-1],)
    assert bool(jnp.all((out >= 0.0) & (out <= 1.0)))
    assert bool(jnp.allclose(out, ref_forward(x), atol=1e-5, rtol=1e-5))

    # 2) Mid batch, not a multiple of 8 -> fused 2-tile grid path.
    x2 = jax.random.normal(k_in, (300, dims[0]), jnp.float32)
    out2 = agent_model_forward(x2, params)
    jax.block_until_ready(out2)
    assert bool(jnp.allclose(out2, ref_forward(x2), atol=1e-5, rtol=1e-5))

    # 3) Larger batch not a multiple of the tile (the old version asserted here).
    x3 = jax.random.normal(k_in, (777, dims[0]), jnp.float32)
    out3 = agent_model_forward(x3, params)
    jax.block_until_ready(out3)
    assert bool(jnp.allclose(out3, ref_forward(x3), atol=1e-5, rtol=1e-5))

    # 4) Layer-wise fallback path (used when weights outgrow VMEM) also works.
    out4 = _layerwise_forward(x2, params)
    jax.block_until_ready(out4)
    assert bool(jnp.allclose(out4, ref_forward(x2), atol=1e-5, rtol=1e-5))

    print("KERNEL_OK")
</pallas_src>

<mosaic_0001>
module attributes {stable_mosaic.version = 11 : i64} {
  func.func @_fused_mlp_kernel(%arg0: memref<8x32xf32, #tpu.memory_space<vmem>>, %arg1: memref<32x64xf32, #tpu.memory_space<vmem>>, %arg2: memref<1x64xf32, #tpu.memory_space<vmem>>, %arg3: memref<64x64xf32, #tpu.memory_space<vmem>>, %arg4: memref<1x64xf32, #tpu.memory_space<vmem>>, %arg5: memref<64x16xf32, #tpu.memory_space<vmem>>, %arg6: memref<1x16xf32, #tpu.memory_space<vmem>>, %arg7: memref<16x4xf32, #tpu.memory_space<vmem>>, %arg8: memref<1x4xf32, #tpu.memory_space<vmem>>, %arg9: memref<8x4xf32, #tpu.memory_space<vmem>>) attributes {dimension_semantics = [], scalar_prefetch = 0 : i64, scratch_operands = 0 : i64, tpu.core_type = #tpu.core_type<tc>} {
    %c0 = arith.constant 0 : index
    %c0_0 = arith.constant 0 : index
    %0 = vector.load %arg0[%c0, %c0_0] : memref<8x32xf32, #tpu.memory_space<vmem>>, vector<8x32xf32>
    %c0_1 = arith.constant 0 : index
    %c0_2 = arith.constant 0 : index
    %1 = vector.load %arg1[%c0_1, %c0_2] : memref<32x64xf32, #tpu.memory_space<vmem>>, vector<32x64xf32>
    %c0_3 = arith.constant 0 : index
    %c0_4 = arith.constant 0 : index
    %2 = vector.load %arg2[%c0_3, %c0_4] : memref<1x64xf32, #tpu.memory_space<vmem>>, vector<1x64xf32>
    %cst = arith.constant dense<0.000000e+00> : vector<8x64xf32>
    %3 = tpu.matmul %0, %1, %cst {dimension_numbers = #tpu.dot_dimension_numbers<[1], [0], [0], [1], [0, 0, 1, 1], [], []>} : vector<8x32xf32>, vector<32x64xf32>, vector<8x64xf32> -> vector<8x64xf32>
    %4 = vector.broadcast %2 : vector<1x64xf32> to vector<8x64xf32>
    %5 = arith.addf %3, %4 : vector<8x64xf32>
    %cst_5 = arith.constant 0.000000e+00 : f32
    %6 = vector.broadcast %cst_5 : f32 to vector<8x64xf32>
    %7 = arith.maximumf %5, %6 : vector<8x64xf32>
    %c0_6 = arith.constant 0 : index
    %c0_7 = arith.constant 0 : index
    %8 = vector.load %arg3[%c0_6, %c0_7] : memref<64x64xf32, #tpu.memory_space<vmem>>, vector<64x64xf32>
    %c0_8 = arith.constant 0 : index
    %c0_9 = arith.constant 0 : index
    %9 = vector.load %arg4[%c0_8, %c0_9] : memref<1x64xf32, #tpu.memory_space<vmem>>, vector<1x64xf32>
    %cst_10 = arith.constant dense<0.000000e+00> : vector<8x64xf32>
    %10 = tpu.matmul %7, %8, %cst_10 {dimension_numbers = #tpu.dot_dimension_numbers<[1], [0], [0], [1], [0, 0, 1, 1], [], []>} : vector<8x64xf32>, vector<64x64xf32>, vector<8x64xf32> -> vector<8x64xf32>
    %11 = vector.broadcast %9 : vector<1x64xf32> to vector<8x64xf32>
    %12 = arith.addf %10, %11 : vector<8x64xf32>
    %cst_11 = arith.constant 0.000000e+00 : f32
    %13 = vector.broadcast %cst_11 : f32 to vector<8x64xf32>
    %14 = arith.maximumf %12, %13 : vector<8x64xf32>
    %c0_12 = arith.constant 0 : index
    %c0_13 = arith.constant 0 : index
    %15 = vector.load %arg5[%c0_12, %c0_13] : memref<64x16xf32, #tpu.memory_space<vmem>>, vector<64x16xf32>
    %c0_14 = arith.constant 0 : index
    %c0_15 = arith.constant 0 : index
    %16 = vector.load %arg6[%c0_14, %c0_15] : memref<1x16xf32, #tpu.memory_space<vmem>>, vector<1x16xf32>
    %cst_16 = arith.constant dense<0.000000e+00> : vector<8x16xf32>
    %17 = tpu.matmul %14, %15, %cst_16 {dimension_numbers = #tpu.dot_dimension_numbers<[1], [0], [0], [1], [0, 0, 1, 1], [], []>} : vector<8x64xf32>, vector<64x16xf32>, vector<8x16xf32> -> vector<8x16xf32>
    %18 = vector.broadcast %16 : vector<1x16xf32> to vector<8x16xf32>
    %19 = arith.addf %17, %18 : vector<8x16xf32>
    %c0_17 = arith.constant 0 : index
    %c0_18 = arith.constant 0 : index
    %20 = vector.load %arg7[%c0_17, %c0_18] : memref<16x4xf32, #tpu.memory_space<vmem>>, vector<16x4xf32>
    %c0_19 = arith.constant 0 : index
    %c0_20 = arith.constant 0 : index
    %21 = vector.load %arg8[%c0_19, %c0_20] : memref<1x4xf32, #tpu.memory_space<vmem>>, vector<1x4xf32>
    %cst_21 = arith.constant dense<0.000000e+00> : vector<8x4xf32>
    %22 = tpu.matmul %19, %20, %cst_21 {dimension_numbers = #tpu.dot_dimension_numbers<[1], [0], [0], [1], [0, 0, 1, 1], [], []>} : vector<8x16xf32>, vector<16x4xf32>, vector<8x4xf32> -> vector<8x4xf32>
    %23 = vector.broadcast %21 : vector<1x4xf32> to vector<8x4xf32>
    %24 = arith.addf %22, %23 : vector<8x4xf32>
    %25 = arith.negf %24 : vector<8x4xf32>
    %26 = math.exp %25 : vector<8x4xf32>
    %cst_22 = arith.constant 1.000000e+00 : f32
    %27 = vector.broadcast %cst_22 : f32 to vector<8x4xf32>
    %28 = arith.addf %27, %26 : vector<8x4xf32>
    %29 = arith.divf %27, %28 : vector<8x4xf32>
    %c0_23 = arith.constant 0 : index
    %c0_24 = arith.constant 0 : index
    %30 = vector.load %arg9[%c0_23, %c0_24] : memref<8x4xf32, #tpu.memory_space<vmem>>, vector<8x4xf32>
    tpu.vector_store %arg9[%c0_23, %c0_24], %29 {strides = array<i32>} : memref<8x4xf32, #tpu.memory_space<vmem>>, vector<8x4xf32>,
    return
  }
}

</mosaic_0001>

<llo_original>
// kernel: _fused_forward.1
$region0: #{_fused_forward.1}
  #allocation0 [shape = 'u32[]', space=smem, size = 0x4, offset = 0x4, fixed_abs, tag = 'smem constant byte address 0x4 - core index']
  #allocation1 [shape = 'u32[72,128]{1,0:T(1,128)}', space=vmem, size = 0x9000, scoped, tag = 'internal scratch']
  %s0 = inlined_call_operand.vmem [shape: f32[8,32], index: 0, kind: input, shape index: {}]
  %s1 = inlined_call_operand.hbm [shape: f32[32,64], index: 1, kind: input, shape index: {}]
  %s2 = inlined_call_operand.vmem [shape: f32[1,64], index: 2, kind: input, shape index: {}]
  %s3 = inlined_call_operand.vmem [shape: f32[64,64], index: 3, kind: input, shape index: {}]
  %s4 = inlined_call_operand.vmem [shape: f32[1,64], index: 4, kind: input, shape index: {}]
  %s5 = inlined_call_operand.vmem [shape: f32[64,16], index: 5, kind: input, shape index: {}]
  %s6 = inlined_call_operand.vmem [shape: f32[1,16], index: 6, kind: input, shape index: {}]
  %s7 = inlined_call_operand.vmem [shape: f32[16,4], index: 7, kind: input, shape index: {}]
  %s8 = inlined_call_operand.vmem [shape: f32[1,4], index: 8, kind: input, shape index: {}]
  %s9 = inlined_call_operand.vmem [shape: f32[8,4], index: 9, kind: output, shape index: {}]
  %s10 = sld [smem:[#allocation0]]
  $region50: #{_fused_forward.1} parent=0
    _
  %s12 = ssub.s32 1, %s10
  %s13 = scalar_select 0, %s12, %s10
  $region1: #{_fused_forward.1} parent=0
    #allocation2 [shape = 'u8[16384]{0}', space=vmem, size = 0x4000, scoped, tag = 'input window, operand 1, single buffered']
    #allocation3 [shape = 's32[1]{0}', space=sflag, size = 0x4, scoped, tag = 'scoped memory for _fused_forward.1']
    %14 = vsyncpa [#allocation3], 0
    // Predicated region
    $region2: #{_fused_forward.1} parent=1 // pred_check
      _
    $region3: #{_fused_forward.1} parent=1 // pred_check_branch
      %16 = sbr.rel (0) target = $region5
    $region4: #{_fused_forward.1} parent=1 // pred_region
      _
    $region5: #{_fused_forward.1} parent=1 // pred_fallthru
      _
    // Predicated region
    $region6: #{_fused_forward.1} parent=1 // pred_check
      _
    $region7: #{_fused_forward.1} parent=1 // pred_check_branch
      %18 = sbr.rel (0) target = $region9
    $region8: #{_fused_forward.1} parent=1 // pred_region
      %20 = vsyncadd [#allocation3], 0
      %s21 = sshll.u32 %s1, 4
      %s22 = int_to_ptr.hbm [resolvable:$true] %s21
      %s23 = sshll.u32 [#allocation2], 4
      %s24 = int_to_ptr.vmem [resolvable:$true] %s23
      %29 = dma.hbm_to_vmem [thread:$0]  %s22, 512, %s24, [#allocation3], 128, 128, 8
    $region9: #{_fused_forward.1} parent=1 // pred_fallthru
      _
    // Predicated region
    $region10: #{_fused_forward.1} parent=1 // pred_check
      _
    $region11: #{_fused_forward.1} parent=1 // pred_check_branch
      %31 = sbr.rel (0) target = $region13
    $region12: #{_fused_forward.1} parent=1 // pred_region
      _
    $region13: #{_fused_forward.1} parent=1 // pred_fallthru
      _
    // Predicated region
    $region14: #{_fused_forward.1} parent=1 // pred_check
      _
    $region15: #{_fused_forward.1} parent=1 // pred_check_branch
      %33 = sbr.rel (0) target = $region17
    $region16: #{_fused_forward.1} parent=1 // pred_region
      _
    $region17: #{_fused_forward.1} parent=1 // pred_fallthru
      _
    // Predicated region
    $region18: #{_fused_forward.1} parent=1 // pred_check
      _
    $region19: #{_fused_forward.1} parent=1 // pred_check_branch
      %35 = sbr.rel (0) target = $region21
    $region20: #{_fused_forward.1} parent=1 // pred_region
      _
    $region21: #{_fused_forward.1} parent=1 // pred_fallthru
      _
    // Predicated region
    $region22: #{_fused_forward.1} parent=1 // pred_check
      _
    $region23: #{_fused_forward.1} parent=1 // pred_check_branch
      %37 = sbr.rel (0) target = $region25
    $region24: #{_fused_forward.1} parent=1 // pred_region
      _
    $region25: #{_fused_forward.1} parent=1 // pred_fallthru
      _
    // Predicated region
    $region26: #{_fused_forward.1} parent=1 // pred_check
      _
    $region27: #{_fused_forward.1} parent=1 // pred_check_branch
      %39 = sbr.rel (0) target = $region29
    $region28: #{_fused_forward.1} parent=1 // pred_region
      _
    $region29: #{_fused_forward.1} parent=1 // pred_fallthru
      _
    // Predicated region
    $region30: #{_fused_forward.1} parent=1 // pred_check
      _
    $region31: #{_fused_forward.1} parent=1 // pred_check_branch
      %41 = sbr.rel (0) target = $region33
    $region32: #{_fused_forward.1} parent=1 // pred_region
      _
    $region33: #{_fused_forward.1} parent=1 // pred_fallthru
      _
    // Predicated region
    $region34: #{_fused_forward.1} parent=1 // pred_check
      _
    $region35: #{_fused_forward.1} parent=1 // pred_check_branch
      %43 = sbr.rel (0) target = $region37
    $region36: #{_fused_forward.1} parent=1 // pred_region
      _
    $region37: #{_fused_forward.1} parent=1 // pred_fallthru
      _
    // Predicated region
    $region38: #{_fused_forward.1} parent=1 // pred_check
      _
    $region39: #{_fused_forward.1} parent=1 // pred_check_branch
      %45 = sbr.rel (0) target = $region41
    $region40: #{_fused_forward.1} parent=1 // pred_region
      %47 = dma.done [#allocation3], 512
    $region41: #{_fused_forward.1} parent=1 // pred_fallthru
      _
    %v48 = vld [vmem:[%s0] sm:$0xff]
    %v49 = vld [vmem:[#allocation2] sm:$0xff]
    %v50 = vld [vmem:[#allocation2 + $0x8] sm:$0xff]
    %v51 = vld [vmem:[#allocation2 + $0x10] sm:$0xff]
    %v52 = vld [vmem:[#allocation2 + $0x18] sm:$0xff]
    %v53 = vld [vmem:[%s2] sm:$0x1]
    %v55 = vperm.slane %v53, 0
    %vm57 = vcmask 261120
    %v59 = vsel %vm57, %v48, 0
    %61 = vmatpush.msra.mxu0 0.0
    %62 = vmatpush.msra.mxu0 0.0
    %63 = vmatpush.msra.mxu0 0.0
    %64 = vmatpush.msra.mxu0 0.0
    %65 = vmatpush.msra.mxu0 0.0
    %66 = vmatpush.msra.mxu0 0.0
    %67 = vmatpush.msra.mxu0 0.0
    %68 = vmatpush.msra.mxu0 0.0
    %69 = vmatpush.msra.mxu0 0.0
    %70 = vmatpush.msra.mxu0 0.0
    %71 = vmatpush.msra.mxu0 0.0
    %72 = vmatpush.msra.mxu0 0.0
    %73 = vmatpush.msra.mxu0 %v52
    %74 = vmatpush.msra.mxu0 %v51
    %75 = vmatpush.msra.mxu0 %v50
    %76 = vmatpush.msra.mxu0 %v49
    %77 = vmatmul.f32.gmra.mxu0 %v59
    %v78 = vpop.f32.mrf.mxu0
    %v79 = vadd.f32 %v55, %v78
    %80 = vdwg.mxu0
    %v81 = vmax.f32 %v79, 0.0
    %v82 = vld [vmem:[%s3] sm:$0xff]
    %v83 = vld [vmem:[%s3 + $0x8] sm:$0xff]
    %v84 = vld [vmem:[%s3 + $0x10] sm:$0xff]
    %v85 = vld [vmem:[%s3 + $0x18] sm:$0xff]
    %v86 = vld [vmem:[%s3 + $0x20] sm:$0xff]
    %v87 = vld [vmem:[%s3 + $0x28] sm:$0xff]
    %v88 = vld [vmem:[%s3 + $0x30] sm:$0xff]
    %v89 = vld [vmem:[%s3 + $0x38] sm:$0xff]
    %v90 = vld [vmem:[%s4] sm:$0x1]
    %v92 = vperm.slane %v90, 0
    %vm94 = vcmask 523264
    %v96 = vsel %vm94, %v81, 0
    %98 = vmatpush.msra.mxu0 0.0
    %99 = vmatpush.msra.mxu0 0.0
    %100 = vmatpush.msra.mxu0 0.0
    %101 = vmatpush.msra.mxu0 0.0
    %102 = vmatpush.msra.mxu0 0.0
    %103 = vmatpush.msra.mxu0 0.0
    %104 = vmatpush.msra.mxu0 0.0
    %105 = vmatpush.msra.mxu0 0.0
    %106 = vmatpush.msra.mxu0 %v89
    %107 = vmatpush.msra.mxu0 %v88
    %108 = vmatpush.msra.mxu0 %v87
    %109 = vmatpush.msra.mxu0 %v86
    %110 = vmatpush.msra.mxu0 %v85
    %111 = vmatpush.msra.mxu0 %v84
    %112 = vmatpush.msra.mxu0 %v83
    %113 = vmatpush.msra.mxu0 %v82
    %114 = vmatmul.f32.gmra.mxu0 %v96
    %v115 = vpop.f32.mrf.mxu0
    %v116 = vadd.f32 %v92, %v115
    %117 = vdwg.mxu0
    %v118 = vmax.f32 %v116, 0.0
    %v119 = vld [vmem:[%s5] sm:$0xff]
    %v120 = vld [vmem:[%s5 + $0x8] sm:$0xff]
    %v121 = vld [vmem:[%s5 + $0x10] sm:$0xff]
    %v122 = vld [vmem:[%s5 + $0x18] sm:$0xff]
    %v123 = vld [vmem:[%s5 + $0x20] sm:$0xff]
    %v124 = vld [vmem:[%s5 + $0x28] sm:$0xff]
    %v125 = vld [vmem:[%s5 + $0x30] sm:$0xff]
    %v126 = vld [vmem:[%s5 + $0x38] sm:$0xff]
    %v127 = vld [vmem:[%s6] sm:$0x1]
    %v129 = vperm.slane %v127, 0
    %v132 = vsel %vm94, %v118, 0
    %134 = vmatpush.msra.mxu0 0.0
    %135 = vmatpush.msra.mxu0 0.0
    %136 = vmatpush.msra.mxu0 0.0
    %137 = vmatpush.msra.mxu0 0.0
    %138 = vmatpush.msra.mxu0 0.0
    %139 = vmatpush.msra.mxu0 0.0
    %140 = vmatpush.msra.mxu0 0.0
    %141 = vmatpush.msra.mxu0 0.0
    %142 = vmatpush.msra.mxu0 %v126
    %143 = vmatpush.msra.mxu0 %v125
    %144 = vmatpush.msra.mxu0 %v124
    %145 = vmatpush.msra.mxu0 %v123
    %146 = vmatpush.msra.mxu0 %v122
    %147 = vmatpush.msra.mxu0 %v121
    %148 = vmatpush.msra.mxu0 %v120
    %149 = vmatpush.msra.mxu0 %v119
    %150 = vmatmul.f32.gmra.mxu0 %v132
    %v151 = vpop.f32.mrf.mxu0
    %v152 = vadd.f32 %v129, %v151
    %153 = vdwg.mxu0
    %v154 = vld [vmem:[%s7] sm:$0xff]
    %v155 = vld [vmem:[%s7 + $0x8] sm:$0xff]
    %v156 = vld [vmem:[%s8] sm:$0x1]
    %v158 = vperm.slane %v156, 0
    %vm160 = vcmask 130048
    %v162 = vsel %vm160, %v152, 0
    %164 = vmatpush.msra.mxu0 0.0
    %165 = vmatpush.msra.mxu0 0.0
    %166 = vmatpush.msra.mxu0 0.0
    %167 = vmatpush.msra.mxu0 0.0
    %168 = vmatpush.msra.mxu0 0.0
    %169 = vmatpush.msra.mxu0 0.0
    %170 = vmatpush.msra.mxu0 0.0
    %171 = vmatpush.msra.mxu0 0.0
    %172 = vmatpush.msra.mxu0 0.0
    %173 = vmatpush.msra.mxu0 0.0
    %174 = vmatpush.msra.mxu0 0.0
    %175 = vmatpush.msra.mxu0 0.0
    %176 = vmatpush.msra.mxu0 0.0
    %177 = vmatpush.msra.mxu0 0.0
    %178 = vmatpush.msra.mxu0 %v155
    %179 = vmatpush.msra.mxu0 %v154
    %180 = vmatmul.f32.gmra.mxu0 %v162
    %v181 = vpop.f32.mrf.mxu0
    %v182 = vadd.f32 %v158, %v181
    %183 = vdwg.mxu0
    %v184 = vxor.u32 %v182, 2147483648
    %v185 = vmul.f32 %v184, 1.442695
    %v186 = vpow.pop %v185
    %v187 = vadd.f32 %v186, 1.0
    %v188 = vrcp.pop %v187
    %v189 = vmul.f32 %v187, %v188
    %v190 = vsub.f32 1.0, %v189
    %v191 = vmul.f32 %v188, %v190
    %v192 = vadd.f32 %v188, %v191
    %vm193 = vweird.f32 %v187
    %vm194 = vweird.f32 %v188
    %vm195 = vmor %vm193, %vm194
    %v196 = vsel %vm195, %v188, %v192
    %v197 = vand.u32 2147483647, %v187
    %vm198 = vcmp.eq.f32.partialorder %v197, 8.507059e+37
    %v199 = vand.u32 %v187, 2147483648
    %v200 = vor.u32 1.1754944e-38, %v199
    %v201 = vsel %vm198, %v200, %v196
    %v202 = vmul.f32 1.0, %v201
    %vm203 = vcmask 31744
    %204 = vst.msk [vmem:[%s9] sm:$0xff] %vm203, %v202
    // Predicated region
    $region42: #{_fused_forward.1} parent=1 // pred_check
      _
    $region43: #{_fused_forward.1} parent=1 // pred_check_branch
      %206 = sbr.rel (0) target = $region45
    $region44: #{_fused_forward.1} parent=1 // pred_region
      _
    $region45: #{_fused_forward.1} parent=1 // pred_fallthru
      _
    // Predicated region
    $region46: #{_fused_forward.1} parent=1 // pred_check
      _
    $region47: #{_fused_forward.1} parent=1 // pred_check_branch
      %208 = sbr.rel (0) target = $region49
    $region48: #{_fused_forward.1} parent=1 // pred_region
      _
    $region49: #{_fused_forward.1} parent=1 // pred_fallthru
      _
    %209 = vsyncpa [#allocation3], 1

</llo_original>
